<compile_context>
chip_gen: v6e
topology: v6e:2x2x1
jax: 0.10.0
libtpu: 0.0.40
codegen_flags: <defaults>
</compile_context>

<pallas_src>
import jax
import jax.numpy as jnp
from jax.experimental import pallas as pl
from jax.experimental.pallas import tpu as pltpu


def _choose_block_b(B):
    """Largest batch tile that still leaves >= 2 (ideally >= 4) grid steps.

    >= 2 even steps lets ("parallel",) shard the batch across v7x's two
    TensorCores; larger tiles amortize per-step pipeline overhead for big B.
    """
    for bb in (1024, 512, 256, 128):
        if B >= 4 * bb:
            return bb
    for bb in (1024, 512, 256, 128):
        if B >= 2 * bb:
            return bb
    return 128


def _seq_kernel(x_ref, w1_ref, b1_ref, w2_ref, b2_ref, o_ref):
    # module 0: Linear(in_f -> hidden). f32 -> bf16 cast happens here on the
    # idle VPU so the wrapper never materializes a padded/cast copy of x.
    x = x_ref[...].astype(jnp.bfloat16)
    h = jnp.dot(x, w1_ref[...], preferred_element_type=jnp.float32)
    # bias add + module 1: ReLU  (f32 on the VPU; exact, v5e-safe)
    h = jnp.maximum(h + b1_ref[...], 0.0)
    # module 2: Linear(hidden -> out_f)
    y = jnp.dot(h.astype(jnp.bfloat16), w2_ref[...],
                preferred_element_type=jnp.float32)
    o_ref[...] = y + b2_ref[...]


@jax.jit
def sequential_forward(x, w1, b1, w2, b2):
    """Fused forward of Sequential(Linear(in,h), ReLU(), Linear(h,out)).

    x : (B, in_f) f32
    w1: (in_f, hidden), b1: (1, hidden)   -- weight stored as PyTorch weight.T
    w2: (hidden, out_f), b2: (1, out_f)
    """
    B, in_f = x.shape
    hidden = w1.shape[1]
    out_f = w2.shape[1]

    block_b = _choose_block_b(B)
    b_rows = ((B + block_b - 1) // block_b) * block_b

    # Only the batch axis is ever padded (and only when B % block_b != 0).
    # Feature axes keep their real sizes: blocks equal to the full array dims
    # are legal, and the narrow output writeback is the big HBM-traffic win.
    x_in = jnp.pad(x, ((0, b_rows - B), (0, 0))) if b_rows != B else x

    # Tiny, fetched once (constant index_map -> VMEM-resident across the grid).
    w1_b = w1.astype(jnp.bfloat16)
    w2_b = w2.astype(jnp.bfloat16)
    b1_f = b1.astype(jnp.float32).reshape(1, hidden)
    b2_f = b2.astype(jnp.float32).reshape(1, out_f)

    grid = (b_rows // block_b,)

    flops = 2 * B * (in_f * hidden + hidden * out_f)
    bytes_accessed = (B * in_f * 4                      # x (f32 in)
                      + in_f * hidden * 2               # w1 (bf16)
                      + hidden * out_f * 2              # w2 (bf16)
                      + (hidden + out_f) * 4            # biases (f32)
                      + B * out_f * 4)                  # output (f32)

    out = pl.pallas_call(
        _seq_kernel,
        out_shape=jax.ShapeDtypeStruct((b_rows, out_f), jnp.float32),
        grid_spec=pl.GridSpec(
            grid=grid,
            in_specs=[
                # x tile marches over the batch (software-pipelined DMA)
                pl.BlockSpec((block_b, in_f), lambda i: (i, 0)),
                # weights / biases: constant block index -> VMEM-resident
                pl.BlockSpec((in_f, hidden), lambda i: (0, 0)),
                pl.BlockSpec((1, hidden), lambda i: (0, 0)),
                pl.BlockSpec((hidden, out_f), lambda i: (0, 0)),
                pl.BlockSpec((1, out_f), lambda i: (0, 0)),
            ],
            out_specs=pl.BlockSpec((block_b, out_f), lambda i: (i, 0)),
        ),
        compiler_params=pltpu.CompilerParams(
            dimension_semantics=("parallel",)),
        cost_estimate=pl.CostEstimate(
            flops=flops, transcendentals=0, bytes_accessed=bytes_accessed),
    )(x_in, w1_b, b1_f, w2_b, b2_f)

    return out[:B] if b_rows != B else out


def init_linear_params(key, fan_in, fan_out, dtype=jnp.float32):
    """Deterministic init matching PyTorch nn.Linear default:
    U(-1/sqrt(fan_in), 1/sqrt(fan_in)) for both weight and bias."""
    kw, kb = jax.random.split(key)
    bound = 1.0 / jnp.sqrt(jnp.float32(fan_in))
    # stored as (fan_in, fan_out)  == PyTorch weight (fan_out, fan_in).T
    w = jax.random.uniform(kw, (fan_in, fan_out), dtype, -bound, bound)
    b = jax.random.uniform(kb, (1, fan_out), dtype, -bound, bound)
    return w, b


if __name__ == "__main__":
    key = jax.random.PRNGKey(0)
    k_x, k_l1, k_l2 = jax.random.split(key, 3)

    # Small but non-trivial batch so the grid has >= 2 steps (v7x megacore).
    B, IN_F, HIDDEN, OUT_F = 256, 32, 64, 16

    x = jax.random.normal(k_x, (B, IN_F), jnp.float32)
    w1, b1 = init_linear_params(k_l1, IN_F, HIDDEN)
    w2, b2 = init_linear_params(k_l2, HIDDEN, OUT_F)

    out = jax.block_until_ready(sequential_forward(x, w1, b1, w2, b2))

    # pure-JAX f32 reference of the same Sequential chain
    ref = jnp.maximum(x @ w1 + b1, 0.0) @ w2 + b2
    assert out.shape == (B, OUT_F)
    # bf16 MXU operands => tolerate ~1e-2 numerical difference vs f32 reference
    assert jnp.allclose(out, ref, atol=2e-2, rtol=2e-2), "mismatch vs reference"

    print("KERNEL_OK")
</pallas_src>

<mosaic_0001>
module attributes {stable_mosaic.version = 11 : i64} {
  func.func @_seq_kernel(%arg0: i32, %arg1: memref<128x32xf32, #tpu.memory_space<vmem>>, %arg2: memref<32x64xbf16, #tpu.memory_space<vmem>>, %arg3: memref<1x64xf32, #tpu.memory_space<vmem>>, %arg4: memref<64x16xbf16, #tpu.memory_space<vmem>>, %arg5: memref<1x16xf32, #tpu.memory_space<vmem>>, %arg6: memref<128x16xf32, #tpu.memory_space<vmem>>) attributes {dimension_semantics = [#tpu.dimension_semantics<parallel>], iteration_bounds = array<i64: 2>, scalar_prefetch = 0 : i64, scratch_operands = 0 : i64, tpu.core_type = #tpu.core_type<tc>, window_params = [{transform_indices = @transform_0, window_bounds = array<i64: 128, 32>}, {pipeline_mode = #tpu.pipeline_mode<synchronous>, transform_indices = @transform_1, window_bounds = array<i64: 32, 64>}, {pipeline_mode = #tpu.pipeline_mode<synchronous>, transform_indices = @transform_2, window_bounds = array<i64: 1, 64>}, {pipeline_mode = #tpu.pipeline_mode<synchronous>, transform_indices = @transform_3, window_bounds = array<i64: 64, 16>}, {pipeline_mode = #tpu.pipeline_mode<synchronous>, transform_indices = @transform_4, window_bounds = array<i64: 1, 16>}, {transform_indices = @transform_5, window_bounds = array<i64: 128, 16>}]} {
    %c0 = arith.constant 0 : index
    %c0_0 = arith.constant 0 : index
    %0 = vector.load %arg1[%c0, %c0_0] : memref<128x32xf32, #tpu.memory_space<vmem>>, vector<128x32xf32>
    %1 = arith.truncf %0 : vector<128x32xf32> to vector<128x32xbf16>
    %c0_1 = arith.constant 0 : index
    %c0_2 = arith.constant 0 : index
    %2 = vector.load %arg2[%c0_1, %c0_2] : memref<32x64xbf16, #tpu.memory_space<vmem>>, vector<32x64xbf16>
    %cst = arith.constant dense<0.000000e+00> : vector<128x64xf32>
    %3 = tpu.matmul %1, %2, %cst {dimension_numbers = #tpu.dot_dimension_numbers<[1], [0], [0], [1], [0, 0, 1, 1], [], []>} : vector<128x32xbf16>, vector<32x64xbf16>, vector<128x64xf32> -> vector<128x64xf32>
    %c0_3 = arith.constant 0 : index
    %c0_4 = arith.constant 0 : index
    %4 = vector.load %arg3[%c0_3, %c0_4] : memref<1x64xf32, #tpu.memory_space<vmem>>, vector<1x64xf32>
    %5 = vector.broadcast %4 : vector<1x64xf32> to vector<128x64xf32>
    %6 = arith.addf %3, %5 : vector<128x64xf32>
    %cst_5 = arith.constant 0.000000e+00 : f32
    %7 = vector.broadcast %cst_5 : f32 to vector<128x64xf32>
    %8 = arith.maximumf %6, %7 : vector<128x64xf32>
    %9 = arith.truncf %8 : vector<128x64xf32> to vector<128x64xbf16>
    %c0_6 = arith.constant 0 : index
    %c0_7 = arith.constant 0 : index
    %10 = vector.load %arg4[%c0_6, %c0_7] : memref<64x16xbf16, #tpu.memory_space<vmem>>, vector<64x16xbf16>
    %cst_8 = arith.constant dense<0.000000e+00> : vector<128x16xf32>
    %11 = tpu.matmul %9, %10, %cst_8 {dimension_numbers = #tpu.dot_dimension_numbers<[1], [0], [0], [1], [0, 0, 1, 1], [], []>} : vector<128x64xbf16>, vector<64x16xbf16>, vector<128x16xf32> -> vector<128x16xf32>
    %c0_9 = arith.constant 0 : index
    %c0_10 = arith.constant 0 : index
    %12 = vector.load %arg5[%c0_9, %c0_10] : memref<1x16xf32, #tpu.memory_space<vmem>>, vector<1x16xf32>
    %13 = vector.broadcast %12 : vector<1x16xf32> to vector<128x16xf32>
    %14 = arith.addf %11, %13 : vector<128x16xf32>
    %c0_11 = arith.constant 0 : index
    %c0_12 = arith.constant 0 : index
    %15 = vector.load %arg6[%c0_11, %c0_12] : memref<128x16xf32, #tpu.memory_space<vmem>>, vector<128x16xf32>
    tpu.vector_store %arg6[%c0_11, %c0_12], %14 {strides = array<i32>} : memref<128x16xf32, #tpu.memory_space<vmem>>, vector<128x16xf32>,
    return
  }
  func.func @transform_0(%arg0: i32) -> (i32, i32) {
    %c0_i32 = arith.constant 0 : i32
    %c0_i32_0 = arith.constant 0 : i32
    return %arg0, %c0_i32 : i32, i32
  }
  func.func @transform_1(%arg0: i32) -> (i32, i32) {
    %c0_i32 = arith.constant 0 : i32
    %c0_i32_0 = arith.constant 0 : i32
    %c0_i32_1 = arith.constant 0 : i32
    return %c0_i32, %c0_i32_0 : i32, i32
  }
  func.func @transform_2(%arg0: i32) -> (i32, i32) {
    %c0_i32 = arith.constant 0 : i32
    %c0_i32_0 = arith.constant 0 : i32
    %c0_i32_1 = arith.constant 0 : i32
    return %c0_i32, %c0_i32_0 : i32, i32
  }
  func.func @transform_3(%arg0: i32) -> (i32, i32) {
    %c0_i32 = arith.constant 0 : i32
    %c0_i32_0 = arith.constant 0 : i32
    %c0_i32_1 = arith.constant 0 : i32
    return %c0_i32, %c0_i32_0 : i32, i32
  }
  func.func @transform_4(%arg0: i32) -> (i32, i32) {
    %c0_i32 = arith.constant 0 : i32
    %c0_i32_0 = arith.constant 0 : i32
    %c0_i32_1 = arith.constant 0 : i32
    return %c0_i32, %c0_i32_0 : i32, i32
  }
  func.func @transform_5(%arg0: i32) -> (i32, i32) {
    %c0_i32 = arith.constant 0 : i32
    %c0_i32_0 = arith.constant 0 : i32
    return %arg0, %c0_i32 : i32, i32
  }
}

</mosaic_0001>

<llo_original>
// kernel: sequential_forward.1
$region0: #{sequential_forward.1}
  #allocation0 [shape = 'u32[]', space=smem, size = 0x4, offset = 0x4, fixed_abs, tag = 'smem constant byte address 0x4 - core index']
  #allocation1 [shape = 'u32[144,128]{1,0:T(1,128)}', space=vmem, size = 0x12000, scoped, tag = 'internal scratch']
  %s0 = inlined_call_operand.vmem [shape: f32[256,32], index: 0, kind: input, shape index: {}]
  %s1 = inlined_call_operand.vmem [shape: bf16[32,64], index: 1, kind: input, shape index: {}]
  %s2 = inlined_call_operand.vmem [shape: f32[1,64], index: 2, kind: input, shape index: {}]
  %s3 = inlined_call_operand.vmem [shape: bf16[64,16], index: 3, kind: input, shape index: {}]
  %s4 = inlined_call_operand.vmem [shape: f32[1,16], index: 4, kind: input, shape index: {}]
  %s5 = inlined_call_operand.vmem [shape: f32[256,16], index: 5, kind: output, shape index: {}]
  %s6 = sld [smem:[#allocation0]]
  $region53: #{sequential_forward.1} parent=0
    _
  %s8 = ssub.s32 1, %s6
  %s9 = scalar_select 0, %s8, %s6
  loop: start=0, step=1, limit=4
  $region2: #{sequential_forward.1} parent=0 // loop_pre_header
    _
  $region3: #{sequential_forward.1} parent=0 // loop_header
    %s11 = sphi 0, %s15
    %p12 = scmp.ge.s32.totalorder %s11, 4
    %s21 = sphi 0, %s23
    %s24 = sphi 0, %s21
    %s25 = sphi 0, %s24
    %s41 = sphi 0, %s25
    %s45 = sphi 0, %s45
    %s47 = sphi 0, %s45
    %s48 = sphi 0, %s47
    %s62 = sphi 0, %s48
    %s66 = sphi 0, %s66
    %s68 = sphi 0, %s66
    %s69 = sphi 0, %s68
    %s83 = sphi 0, %s69
    %s87 = sphi 0, %s87
    %s89 = sphi 0, %s87
    %s90 = sphi 0, %s89
    %s104 = sphi 0, %s90
    %s108 = sphi 0, %s108
    %s110 = sphi 0, %s108
    %s111 = sphi 0, %s110
    %s125 = sphi 0, %s111
    %s131 = sphi 0, %s133
    %s134 = sphi 0, %s131
    %s135 = sphi 0, %s134
    %s151 = sphi 0, %s135
  $region4: #{sequential_forward.1} parent=0 // loop_header_branch
    %14 = sbr.rel (%p12) target = $region8
  $region5: #{sequential_forward.1} parent=0 // loop_body
    %s16 = ssub.s32 %s11, 1
    %s17 = ssub.s32 %s11, 2
    %s18 = sadd.s32 %s11, 1
    %s19 = ssub.s32 %s11, %s18
    %p20 = scmp.eq.s32.totalorder %s19, 0
    %s22 = sadd.s32 %s21, 1
    %s23 = scalar_select %p20, %s21, %s22
    %p26 = pneg %p20
    %p27 = scmp.eq.s32.totalorder %s11, 1
    %p28 = por %p26, %p27
    %p29 = scmp.ne.s32.totalorder %s21, %s24
    %p30 = scmp.eq.s32.totalorder %s11, 0
    %p31 = por %p29, %p30
    %p32 = scmp.ne.s32.totalorder %s21, %s24
    %p33 = scmp.eq.s32.totalorder %s16, 1
    %p34 = por %p32, %p33
    %p35 = scmp.ne.s32.totalorder %s24, %s25
    %p36 = scmp.eq.s32.totalorder %s16, 0
    %p37 = por %p35, %p36
    %p38 = scmp.ne.s32.totalorder %s24, %s25
    %p39 = scmp.eq.s32.totalorder %s17, 1
    %p40 = por %p38, %p39
    %p42 = scmp.ne.s32.totalorder %s25, %s41
    %p43 = scmp.eq.s32.totalorder %s17, 0
    %p44 = por %p42, %p43
    %s46 = sadd.s32 %s45, 1
    %p49 = scmp.eq.s32.totalorder %s11, 1
    %p50 = scmp.ne.s32.totalorder %s45, %s47
    %p51 = scmp.eq.s32.totalorder %s11, 0
    %p52 = por %p50, %p51
    %p53 = scmp.ne.s32.totalorder %s45, %s47
    %p54 = scmp.eq.s32.totalorder %s16, 1
    %p55 = por %p53, %p54
    %p56 = scmp.ne.s32.totalorder %s47, %s48
    %p57 = scmp.eq.s32.totalorder %s16, 0
    %p58 = por %p56, %p57
    %p59 = scmp.ne.s32.totalorder %s47, %s48
    %p60 = scmp.eq.s32.totalorder %s17, 1
    %p61 = por %p59, %p60
    %p63 = scmp.ne.s32.totalorder %s48, %s62
    %p64 = scmp.eq.s32.totalorder %s17, 0
    %p65 = por %p63, %p64
    %s67 = sadd.s32 %s66, 1
    %p70 = scmp.eq.s32.totalorder %s11, 1
    %p71 = scmp.ne.s32.totalorder %s66, %s68
    %p72 = scmp.eq.s32.totalorder %s11, 0
    %p73 = por %p71, %p72
    %p74 = scmp.ne.s32.totalorder %s66, %s68
    %p75 = scmp.eq.s32.totalorder %s16, 1
    %p76 = por %p74, %p75
    %p77 = scmp.ne.s32.totalorder %s68, %s69
    %p78 = scmp.eq.s32.totalorder %s16, 0
    %p79 = por %p77, %p78
    %p80 = scmp.ne.s32.totalorder %s68, %s69
    %p81 = scmp.eq.s32.totalorder %s17, 1
    %p82 = por %p80, %p81
    %p84 = scmp.ne.s32.totalorder %s69, %s83
    %p85 = scmp.eq.s32.totalorder %s17, 0
    %p86 = por %p84, %p85
    %s88 = sadd.s32 %s87, 1
    %p91 = scmp.eq.s32.totalorder %s11, 1
    %p92 = scmp.ne.s32.totalorder %s87, %s89
    %p93 = scmp.eq.s32.totalorder %s11, 0
    %p94 = por %p92, %p93
    %p95 = scmp.ne.s32.totalorder %s87, %s89
    %p96 = scmp.eq.s32.totalorder %s16, 1
    %p97 = por %p95, %p96
    %p98 = scmp.ne.s32.totalorder %s89, %s90
    %p99 = scmp.eq.s32.totalorder %s16, 0
    %p100 = por %p98, %p99
    %p101 = scmp.ne.s32.totalorder %s89, %s90
    %p102 = scmp.eq.s32.totalorder %s17, 1
    %p103 = por %p101, %p102
    %p105 = scmp.ne.s32.totalorder %s90, %s104
    %p106 = scmp.eq.s32.totalorder %s17, 0
    %p107 = por %p105, %p106
    %s109 = sadd.s32 %s108, 1
    %p112 = scmp.eq.s32.totalorder %s11, 1
    %p113 = scmp.ne.s32.totalorder %s108, %s110
    %p114 = scmp.eq.s32.totalorder %s11, 0
    %p115 = por %p113, %p114
    %p116 = scmp.ne.s32.totalorder %s108, %s110
    %p117 = scmp.eq.s32.totalorder %s16, 1
    %p118 = por %p116, %p117
    %p119 = scmp.ne.s32.totalorder %s110, %s111
    %p120 = scmp.eq.s32.totalorder %s16, 0
    %p121 = por %p119, %p120
    %p122 = scmp.ne.s32.totalorder %s110, %s111
    %p123 = scmp.eq.s32.totalorder %s17, 1
    %p124 = por %p122, %p123
    %p126 = scmp.ne.s32.totalorder %s111, %s125
    %p127 = scmp.eq.s32.totalorder %s17, 0
    %p128 = por %p126, %p127
    %s129 = ssub.s32 %s11, %s18
    %p130 = scmp.eq.s32.totalorder %s129, 0
    %s132 = sadd.s32 %s131, 1
    %s133 = scalar_select %p130, %s131, %s132
    %p136 = pneg %p130
    %p137 = scmp.eq.s32.totalorder %s11, 1
    %p138 = por %p136, %p137
    %p139 = scmp.ne.s32.totalorder %s131, %s134
    %p140 = scmp.eq.s32.totalorder %s11, 0
    %p141 = por %p139, %p140
    %p142 = scmp.ne.s32.totalorder %s131, %s134
    %p143 = scmp.eq.s32.totalorder %s16, 1
    %p144 = por %p142, %p143
    %p145 = scmp.ne.s32.totalorder %s134, %s135
    %p146 = scmp.eq.s32.totalorder %s16, 0
    %p147 = por %p145, %p146
    %p148 = scmp.ne.s32.totalorder %s134, %s135
    %p149 = scmp.eq.s32.totalorder %s17, 1
    %p150 = por %p148, %p149
    %p152 = scmp.ne.s32.totalorder %s135, %s151
    %p153 = scmp.eq.s32.totalorder %s17, 0
    %p154 = por %p152, %p153
    %p155 = scmp.le.s32.totalorder 1, %s11
    %p156 = scmp.lt.s32.totalorder %s11, 3
    %p157 = pnand %p155, %p156
    %p158 = pneg %p157
    // Predicated region
    $region9: #{sequential_forward.1} parent=5 // pred_check
      _
    $region10: #{sequential_forward.1} parent=5 // pred_check_branch
      %160 = sbr.rel (%p157) target = $region12
    $region11: #{sequential_forward.1} parent=5 // pred_region
      %s161 = ssub.s32 %s11, 1
      // Predicated region
      $region13: #{sequential_forward.1} parent=11 // pred_check
        %p162 = pneg %p58
      $region14: #{sequential_forward.1} parent=11 // pred_check_branch
        %164 = sbr.rel (%p162) target = $region16
      $region15: #{sequential_forward.1} parent=11 // pred_region
        _
      $region16: #{sequential_forward.1} parent=11 // pred_fallthru
        _
      // Predicated region
      $region17: #{sequential_forward.1} parent=11 // pred_check
        %p165 = pneg %p79
      $region18: #{sequential_forward.1} parent=11 // pred_check_branch
        %167 = sbr.rel (%p165) target = $region20
      $region19: #{sequential_forward.1} parent=11 // pred_region
        _
      $region20: #{sequential_forward.1} parent=11 // pred_fallthru
        _
      // Predicated region
      $region21: #{sequential_forward.1} parent=11 // pred_check
        %p168 = pneg %p100
      $region22: #{sequential_forward.1} parent=11 // pred_check_branch
        %170 = sbr.rel (%p168) target = $region24
      $region23: #{sequential_forward.1} parent=11 // pred_region
        _
      $region24: #{sequential_forward.1} parent=11 // pred_fallthru
        _
      // Predicated region
      $region25: #{sequential_forward.1} parent=11 // pred_check
        %p171 = pneg %p121
      $region26: #{sequential_forward.1} parent=11 // pred_check_branch
        %173 = sbr.rel (%p171) target = $region28
      $region27: #{sequential_forward.1} parent=11 // pred_region
        _
      $region28: #{sequential_forward.1} parent=11 // pred_fallthru
        _
    $region12: #{sequential_forward.1} parent=5 // pred_fallthru
      _
    %p174 = scmp.lt.s32.totalorder %s11, 2
    // Predicated region
    $region29: #{sequential_forward.1} parent=5 // pred_check
      %p175 = pneg %p174
    $region30: #{sequential_forward.1} parent=5 // pred_check_branch
      %177 = sbr.rel (%p175) target = $region32
    $region31: #{sequential_forward.1} parent=5 // pred_region
      // Predicated region
      $region33: #{sequential_forward.1} parent=31 // pred_check
        %p178 = pneg %p31
      $region34: #{sequential_forward.1} parent=31 // pred_check_branch
        %180 = sbr.rel (%p178) target = $region36
      $region35: #{sequential_forward.1} parent=31 // pred_region
        %s181 = smul.u32 16, %s11
        %p182 = scmp.lt.s32.totalorder %s181, 31
        %s183 = scalar_select %p182, %s181, 31
        %s184 = smul.addr %s183, 8
        %s185 = scalar_lea.vmem %s0, %s184
        %s186 = smul.u32 16, %s11
      $region36: #{sequential_forward.1} parent=31 // pred_fallthru
        _
    $region32: #{sequential_forward.1} parent=5 // pred_fallthru
      _
    %p187 = scmp.le.s32.totalorder 1, %s11
    %p188 = scmp.lt.s32.totalorder %s11, 3
    %p189 = pnand %p187, %p188
    %p190 = pneg %p189
    // Predicated region
    $region37: #{sequential_forward.1} parent=5 // pred_check
      _
    $region38: #{sequential_forward.1} parent=5 // pred_check_branch
      %192 = sbr.rel (%p189) target = $region40
    $region39: #{sequential_forward.1} parent=5 // pred_region
      %s193 = ssub.s32 %s11, 1
      %s194 = smul.u32 16, %s16
      %p195 = scmp.lt.s32.totalorder %s194, 31
      %s196 = scalar_select %p195, %s194, 31
      %s197 = smul.addr %s196, 8
      %s198 = scalar_lea.vmem %s0, %s197
      %p199 = pneg %p37
      %p200 = pneg %p34
      %p201 = pneg %p58
      %p202 = pneg %p55
      %p203 = pneg %p79
      %p204 = pneg %p76
      %p205 = pneg %p100
      %p206 = pneg %p97
      %p207 = pneg %p121
      %p208 = pneg %p118
      %p209 = pneg %p147
      %p210 = pneg %p144
      %s211 = smul.u32 16, %s16
      %p212 = scmp.lt.s32.totalorder %s211, 31
      %s213 = scalar_select %p212, %s211, 31
      %s214 = smul.addr %s213, 8
      %s215 = scalar_lea.vmem %s5, %s214
      %s216 = smul.u32 16, %s16
      %p217 = scmp.lt.s32.totalorder %s216, 31
      %s218 = scalar_select %p217, %s216, 31
      %s219 = smul.addr %s218, 8
      %s220 = scalar_lea.vmem %s0, %s219
      %s221 = smul.u32 16, %s16
      %s222 = smul.u32 16, %s16
      %p223 = scmp.lt.s32.totalorder %s222, 31
      %s224 = scalar_select %p223, %s222, 31
      %s225 = smul.addr %s224, 8
      %s226 = scalar_lea.vmem %s5, %s225
      %s227 = smul.u32 16, %s16
      %v229 = vld [vmem:[%s220] sm:$0xff]
      %v230 = vld [vmem:[%s220 + $0x8] sm:$0xff]
      %v231 = vld [vmem:[%s220 + $0x10] sm:$0xff]
      %v232 = vld [vmem:[%s220 + $0x18] sm:$0xff]
      %v233 = vld [vmem:[%s220 + $0x20] sm:$0xff]
      %v234 = vld [vmem:[%s220 + $0x28] sm:$0xff]
      %v235 = vld [vmem:[%s220 + $0x30] sm:$0xff]
      %v236 = vld [vmem:[%s220 + $0x38] sm:$0xff]
      %v237 = vld [vmem:[%s220 + $0x40] sm:$0xff]
      %v238 = vld [vmem:[%s220 + $0x48] sm:$0xff]
      %v239 = vld [vmem:[%s220 + $0x50] sm:$0xff]
      %v240 = vld [vmem:[%s220 + $0x58] sm:$0xff]
      %v241 = vld [vmem:[%s220 + $0x60] sm:$0xff]
      %v242 = vld [vmem:[%s220 + $0x68] sm:$0xff]
      %v243 = vld [vmem:[%s220 + $0x70] sm:$0xff]
      %v244 = vld [vmem:[%s220 + $0x78] sm:$0xff]
      %v245 = vpack.c.bf16 %v230, %v229
      %v246 = vpack.c.bf16 %v232, %v231
      %v247 = vpack.c.bf16 %v234, %v233
      %v248 = vpack.c.bf16 %v236, %v235
      %v249 = vpack.c.bf16 %v238, %v237
      %v250 = vpack.c.bf16 %v240, %v239
      %v251 = vpack.c.bf16 %v242, %v241
      %v252 = vpack.c.bf16 %v244, %v243
      %v253 = vld [vmem:[%s1] sm:$0xf]
      %v254 = vld [vmem:[%s1 + $0x4] sm:$0xf]
      %v255 = vld [vmem:[%s1 + $0x8] sm:$0xf]
      %v256 = vld [vmem:[%s1 + $0xc] sm:$0xf]
      %v257 = vld [vmem:[%s2] sm:$0x1]
      %v259 = vlaneseq
      %v260 = vshrl.u32 %v259, 7
      %v261 = vsub.s32 0, %v260
      %v262 = vrot.slane %v257, %v261
      %v268 = vunpack.c.l.b16 %v253
      %v269 = vunpack.c.l.b16 %v254
      %v270 = vunpack.c.l.b16 %v255
      %v271 = vunpack.c.l.b16 %v256
      %v272 = vpack.c.b16 %v269, %v268
      %v273 = vpack.c.b16 %v271, %v270
      %vm276 = vcmask 261120
      %v278 = vsel %vm276, %v245, 0
      %v281 = vsel %vm276, %v246, 0
      %v284 = vsel %vm276, %v247, 0
      %v287 = vsel %vm276, %v248, 0
      %v290 = vsel %vm276, %v249, 0
      %v293 = vsel %vm276, %v250, 0
      %v296 = vsel %vm276, %v251, 0
      %v299 = vsel %vm276, %v252, 0
      %301 = vmatprep.subr.bf16.mxu0 0
      %302 = vmatpush1.bf16.msra.mxu0 0
      %303 = vmatprep.subr.bf16.mxu0 0
      %304 = vmatpush1.bf16.msra.mxu0 0
      %305 = vmatprep.subr.bf16.mxu0 0
      %306 = vmatpush1.bf16.msra.mxu0 0
      %307 = vmatprep.subr.bf16.mxu0 0
      %308 = vmatpush1.bf16.msra.mxu0 0
      %309 = vmatprep.subr.bf16.mxu0 0
      %310 = vmatpush1.bf16.msra.mxu0 0
      %311 = vmatprep.subr.bf16.mxu0 0
      %312 = vmatpush1.bf16.msra.mxu0 0
      %313 = vmatprep.subr.bf16.mxu0 0
      %314 = vmatpush1.bf16.msra.mxu0 %v273
      %315 = vmatprep.subr.bf16.mxu0 0
      %316 = vmatpush1.bf16.msra.mxu0 %v272
      %317 = vmatprep.subr.bf16.mxu0 0
      %318 = vmatpush2.bf16.msra.mxu0 0
      %319 = vmatprep.subr.bf16.mxu0 0
      %320 = vmatpush2.bf16.msra.mxu0 0
      %321 = vmatprep.subr.bf16.mxu0 0
      %322 = vmatpush2.bf16.msra.mxu0 0
      %323 = vmatprep.subr.bf16.mxu0 0
      %324 = vmatpush2.bf16.msra.mxu0 0
      %325 = vmatprep.subr.bf16.mxu0 0
      %326 = vmatpush2.bf16.msra.mxu0 0
      %327 = vmatprep.subr.bf16.mxu0 0
      %328 = vmatpush2.bf16.msra.mxu0 0
      %329 = vmatprep.subr.bf16.mxu0 0
      %330 = vmatpush2.bf16.msra.mxu0 0
      %331 = vmatprep.subr.bf16.mxu0 0
      %332 = vmatpush2.bf16.msra.mxu0 0
      %333 = vmatprep.mubr.bf16.mxu0 0
      %334 = vmatmul.mubr.bf16.gmra.mxu0 %v278
      %v335 = vpop.f32.mrf.mxu0
      %v336 = vadd.f32 %v262, %v335
      %v337 = vpop.f32.mrf.mxu0
      %v338 = vpop.f32.mrf.mxu0
      %v339 = vadd.f32 %v262, %v338
      %v340 = vpop.f32.mrf.mxu0
      %341 = vmatprep.mubr.bf16.mxu0 0
      %342 = vmatmul.mubr.bf16.gmra.mxu0 %v281
      %v343 = vpop.f32.mrf.mxu0
      %v344 = vadd.f32 %v262, %v343
      %v345 = vpop.f32.mrf.mxu0
      %v346 = vpop.f32.mrf.mxu0
      %v347 = vadd.f32 %v262, %v346
      %v348 = vpop.f32.mrf.mxu0
      %349 = vmatprep.mubr.bf16.mxu0 0
      %350 = vmatmul.mubr.bf16.gmra.mxu0 %v284
      %v351 = vpop.f32.mrf.mxu0
      %v352 = vadd.f32 %v262, %v351
      %v353 = vpop.f32.mrf.mxu0
      %v354 = vpop.f32.mrf.mxu0
      %v355 = vadd.f32 %v262, %v354
      %v356 = vpop.f32.mrf.mxu0
      %357 = vmatprep.mubr.bf16.mxu0 0
      %358 = vmatmul.mubr.bf16.gmra.mxu0 %v287
      %v359 = vpop.f32.mrf.mxu0
      %v360 = vadd.f32 %v262, %v359
      %v361 = vpop.f32.mrf.mxu0
      %v362 = vpop.f32.mrf.mxu0
      %v363 = vadd.f32 %v262, %v362
      %v364 = vpop.f32.mrf.mxu0
      %365 = vmatprep.mubr.bf16.mxu0 0
      %366 = vmatmul.mubr.bf16.gmra.mxu0 %v290
      %v367 = vpop.f32.mrf.mxu0
      %v368 = vadd.f32 %v262, %v367
      %v369 = vpop.f32.mrf.mxu0
      %v370 = vpop.f32.mrf.mxu0
      %v371 = vadd.f32 %v262, %v370
      %v372 = vpop.f32.mrf.mxu0
      %373 = vmatprep.mubr.bf16.mxu0 0
      %374 = vmatmul.mubr.bf16.gmra.mxu0 %v293
      %v375 = vpop.f32.mrf.mxu0
      %v376 = vadd.f32 %v262, %v375
      %v377 = vpop.f32.mrf.mxu0
      %v378 = vpop.f32.mrf.mxu0
      %v379 = vadd.f32 %v262, %v378
      %v380 = vpop.f32.mrf.mxu0
      %381 = vmatprep.mubr.bf16.mxu0 0
      %382 = vmatmul.mubr.bf16.gmra.mxu0 %v296
      %v383 = vpop.f32.mrf.mxu0
      %v384 = vadd.f32 %v262, %v383
      %v385 = vpop.f32.mrf.mxu0
      %v386 = vpop.f32.mrf.mxu0
      %v387 = vadd.f32 %v262, %v386
      %v388 = vpop.f32.mrf.mxu0
      %389 = vmatprep.mubr.bf16.mxu0 0
      %390 = vmatmul.mubr.bf16.gmra.mxu0 %v299
      %v391 = vpop.f32.mrf.mxu0
      %v392 = vadd.f32 %v262, %v391
      %v393 = vpop.f32.mrf.mxu0
      %v394 = vpop.f32.mrf.mxu0
      %v395 = vadd.f32 %v262, %v394
      %v396 = vpop.f32.mrf.mxu0
      %397 = vdwg.mxu0
      %v398 = vmax.f32 %v336, 0.0
      %v399 = vmax.f32 %v339, 0.0
      %v400 = vmax.f32 %v344, 0.0
      %v401 = vmax.f32 %v347, 0.0
      %v402 = vmax.f32 %v352, 0.0
      %v403 = vmax.f32 %v355, 0.0
      %v404 = vmax.f32 %v360, 0.0
      %v405 = vmax.f32 %v363, 0.0
      %v406 = vmax.f32 %v368, 0.0
      %v407 = vmax.f32 %v371, 0.0
      %v408 = vmax.f32 %v376, 0.0
      %v409 = vmax.f32 %v379, 0.0
      %v410 = vmax.f32 %v384, 0.0
      %v411 = vmax.f32 %v387, 0.0
      %v412 = vmax.f32 %v392, 0.0
      %v413 = vmax.f32 %v395, 0.0
      %v414 = vpack.c.bf16 %v399, %v398
      %v415 = vpack.c.bf16 %v401, %v400
      %v416 = vpack.c.bf16 %v403, %v402
      %v417 = vpack.c.bf16 %v405, %v404
      %v418 = vpack.c.bf16 %v407, %v406
      %v419 = vpack.c.bf16 %v409, %v408
      %v420 = vpack.c.bf16 %v411, %v410
      %v421 = vpack.c.bf16 %v413, %v412
      %v422 = vld [vmem:[%s3] sm:$0xf]
      %v423 = vld [vmem:[%s3 + $0x4] sm:$0xf]
      %v424 = vld [vmem:[%s3 + $0x8] sm:$0xf]
      %v425 = vld [vmem:[%s3 + $0xc] sm:$0xf]
      %v426 = vld [vmem:[%s3 + $0x10] sm:$0xf]
      %v427 = vld [vmem:[%s3 + $0x14] sm:$0xf]
      %v428 = vld [vmem:[%s3 + $0x18] sm:$0xf]
      %v429 = vld [vmem:[%s3 + $0x1c] sm:$0xf]
      %v430 = vld [vmem:[%s4] sm:$0x1]
      %v432 = vlaneseq
      %v433 = vshrl.u32 %v432, 7
      %v434 = vsub.s32 0, %v433
      %v435 = vrot.slane %v430, %v434
      %v445 = vunpack.c.l.b16 %v422
      %v446 = vunpack.c.l.b16 %v423
      %v447 = vunpack.c.l.b16 %v424
      %v448 = vunpack.c.l.b16 %v425
      %v449 = vunpack.c.l.b16 %v426
      %v450 = vunpack.c.l.b16 %v427
      %v451 = vunpack.c.l.b16 %v428
      %v452 = vunpack.c.l.b16 %v429
      %v453 = vpack.c.b16 %v446, %v445
      %v454 = vpack.c.b16 %v448, %v447
      %v455 = vpack.c.b16 %v450, %v449
      %v456 = vpack.c.b16 %v452, %v451
      %vm461 = vcmask 523264
      %v463 = vsel %vm461, %v414, 0
      %v466 = vsel %vm461, %v415, 0
      %v469 = vsel %vm461, %v416, 0
      %v472 = vsel %vm461, %v417, 0
      %v475 = vsel %vm461, %v418, 0
      %v478 = vsel %vm461, %v419, 0
      %v481 = vsel %vm461, %v420, 0
      %v484 = vsel %vm461, %v421, 0
      %486 = vmatprep.subr.bf16.mxu0 0
      %487 = vmatpush1.bf16.msra.mxu0 0
      %488 = vmatprep.subr.bf16.mxu0 0
      %489 = vmatpush1.bf16.msra.mxu0 0
      %490 = vmatprep.subr.bf16.mxu0 0
      %491 = vmatpush1.bf16.msra.mxu0 0
      %492 = vmatprep.subr.bf16.mxu0 0
      %493 = vmatpush1.bf16.msra.mxu0 0
      %494 = vmatprep.subr.bf16.mxu0 0
      %495 = vmatpush1.bf16.msra.mxu0 %v456
      %496 = vmatprep.subr.bf16.mxu0 0
      %497 = vmatpush1.bf16.msra.mxu0 %v455
      %498 = vmatprep.subr.bf16.mxu0 0
      %499 = vmatpush1.bf16.msra.mxu0 %v454
      %500 = vmatprep.subr.bf16.mxu0 0
      %501 = vmatpush1.bf16.msra.mxu0 %v453
      %502 = vmatprep.subr.bf16.mxu0 0
      %503 = vmatpush2.bf16.msra.mxu0 0
      %504 = vmatprep.subr.bf16.mxu0 0
      %505 = vmatpush2.bf16.msra.mxu0 0
      %506 = vmatprep.subr.bf16.mxu0 0
      %507 = vmatpush2.bf16.msra.mxu0 0
      %508 = vmatprep.subr.bf16.mxu0 0
      %509 = vmatpush2.bf16.msra.mxu0 0
      %510 = vmatprep.subr.bf16.mxu0 0
      %511 = vmatpush2.bf16.msra.mxu0 0
      %512 = vmatprep.subr.bf16.mxu0 0
      %513 = vmatpush2.bf16.msra.mxu0 0
      %514 = vmatprep.subr.bf16.mxu0 0
      %515 = vmatpush2.bf16.msra.mxu0 0
      %516 = vmatprep.subr.bf16.mxu0 0
      %517 = vmatpush2.bf16.msra.mxu0 0
      %518 = vmatprep.mubr.bf16.mxu0 0
      %519 = vmatmul.mubr.bf16.gmra.mxu0 %v463
      %v520 = vpop.f32.mrf.mxu0
      %v521 = vadd.f32 %v435, %v520
      %v522 = vpop.f32.mrf.mxu0
      %v523 = vpop.f32.mrf.mxu0
      %v524 = vadd.f32 %v435, %v523
      %v525 = vpop.f32.mrf.mxu0
      %526 = vmatprep.mubr.bf16.mxu0 0
      %527 = vmatmul.mubr.bf16.gmra.mxu0 %v466
      %v528 = vpop.f32.mrf.mxu0
      %v529 = vadd.f32 %v435, %v528
      %v530 = vpop.f32.mrf.mxu0
      %v531 = vpop.f32.mrf.mxu0
      %v532 = vadd.f32 %v435, %v531
      %v533 = vpop.f32.mrf.mxu0
      %534 = vmatprep.mubr.bf16.mxu0 0
      %535 = vmatmul.mubr.bf16.gmra.mxu0 %v469
      %v536 = vpop.f32.mrf.mxu0
      %v537 = vadd.f32 %v435, %v536
      %v538 = vpop.f32.mrf.mxu0
      %v539 = vpop.f32.mrf.mxu0
      %v540 = vadd.f32 %v435, %v539
      %v541 = vpop.f32.mrf.mxu0
      %542 = vmatprep.mubr.bf16.mxu0 0
      %543 = vmatmul.mubr.bf16.gmra.mxu0 %v472
      %v544 = vpop.f32.mrf.mxu0
      %v545 = vadd.f32 %v435, %v544
      %v546 = vpop.f32.mrf.mxu0
      %v547 = vpop.f32.mrf.mxu0
      %v548 = vadd.f32 %v435, %v547
      %v549 = vpop.f32.mrf.mxu0
      %550 = vmatprep.mubr.bf16.mxu0 0
      %551 = vmatmul.mubr.bf16.gmra.mxu0 %v475
      %v552 = vpop.f32.mrf.mxu0
      %v553 = vadd.f32 %v435, %v552
      %v554 = vpop.f32.mrf.mxu0
      %v555 = vpop.f32.mrf.mxu0
      %v556 = vadd.f32 %v435, %v555
      %v557 = vpop.f32.mrf.mxu0
      %558 = vmatprep.mubr.bf16.mxu0 0
      %559 = vmatmul.mubr.bf16.gmra.mxu0 %v478
      %v560 = vpop.f32.mrf.mxu0
      %v561 = vadd.f32 %v435, %v560
      %v562 = vpop.f32.mrf.mxu0
      %v563 = vpop.f32.mrf.mxu0
      %v564 = vadd.f32 %v435, %v563
      %v565 = vpop.f32.mrf.mxu0
      %566 = vmatprep.mubr.bf16.mxu0 0
      %567 = vmatmul.mubr.bf16.gmra.mxu0 %v481
      %v568 = vpop.f32.mrf.mxu0
      %v569 = vadd.f32 %v435, %v568
      %v570 = vpop.f32.mrf.mxu0
      %v571 = vpop.f32.mrf.mxu0
      %v572 = vadd.f32 %v435, %v571
      %v573 = vpop.f32.mrf.mxu0
      %574 = vmatprep.mubr.bf16.mxu0 0
      %575 = vmatmul.mubr.bf16.gmra.mxu0 %v484
      %v576 = vpop.f32.mrf.mxu0
      %v577 = vadd.f32 %v435, %v576
      %v578 = vpop.f32.mrf.mxu0
      %v579 = vpop.f32.mrf.mxu0
      %v580 = vadd.f32 %v435, %v579
      %v581 = vpop.f32.mrf.mxu0
      %582 = vdwg.mxu0
      %vm583 = vcmask 130048
      %584 = vst.msk [vmem:[%s226] sm:$0xff] %vm583, %v521
      %585 = vst.msk [vmem:[%s226 + $0x8] sm:$0xff] %vm583, %v524
      %586 = vst.msk [vmem:[%s226 + $0x10] sm:$0xff] %vm583, %v529
      %587 = vst.msk [vmem:[%s226 + $0x18] sm:$0xff] %vm583, %v532
      %588 = vst.msk [vmem:[%s226 + $0x20] sm:$0xff] %vm583, %v537
      %589 = vst.msk [vmem:[%s226 + $0x28] sm:$0xff] %vm583, %v540
      %590 = vst.msk [vmem:[%s226 + $0x30] sm:$0xff] %vm583, %v545
      %591 = vst.msk [vmem:[%s226 + $0x38] sm:$0xff] %vm583, %v548
      %592 = vst.msk [vmem:[%s226 + $0x40] sm:$0xff] %vm583, %v553
      %593 = vst.msk [vmem:[%s226 + $0x48] sm:$0xff] %vm583, %v556
      %594 = vst.msk [vmem:[%s226 + $0x50] sm:$0xff] %vm583, %v561
      %595 = vst.msk [vmem:[%s226 + $0x58] sm:$0xff] %vm583, %v564
      %596 = vst.msk [vmem:[%s226 + $0x60] sm:$0xff] %vm583, %v569
      %597 = vst.msk [vmem:[%s226 + $0x68] sm:$0xff] %vm583, %v572
      %598 = vst.msk [vmem:[%s226 + $0x70] sm:$0xff] %vm583, %v577
      %599 = vst.msk [vmem:[%s226 + $0x78] sm:$0xff] %vm583, %v580
      %s600 = smul.u32 16, %s16
      %p601 = scmp.lt.s32.totalorder %s600, 31
      %s602 = scalar_select %p601, %s600, 31
      %s603 = smul.addr %s602, 8
      %s604 = scalar_lea.vmem %s5, %s603
      // Predicated region
      $region41: #{sequential_forward.1} parent=39 // pred_check
        %p605 = pneg %p144
      $region42: #{sequential_forward.1} parent=39 // pred_check_branch
        %607 = sbr.rel (%p605) target = $region44
      $region43: #{sequential_forward.1} parent=39 // pred_region
        %s608 = smul.u32 16, %s16
      $region44: #{sequential_forward.1} parent=39 // pred_fallthru
        _
    $region40: #{sequential_forward.1} parent=5 // pred_fallthru
      _
    %p609 = scmp.le.s32.totalorder 2, %s11
    // Predicated region
    $region45: #{sequential_forward.1} parent=5 // pred_check
      %p610 = pneg %p609
    $region46: #{sequential_forward.1} parent=5 // pred_check_branch
      %612 = sbr.rel (%p610) target = $region48
    $region47: #{sequential_forward.1} parent=5 // pred_region
      %s613 = ssub.s32 %s11, 2
      // Predicated region
      $region49: #{sequential_forward.1} parent=47 // pred_check
        %p614 = pneg %p150
      $region50: #{sequential_forward.1} parent=47 // pred_check_branch
        %616 = sbr.rel (%p614) target = $region52
      $region51: #{sequential_forward.1} parent=47 // pred_region
        %s617 = smul.u32 16, %s17
        %p618 = scmp.lt.s32.totalorder %s617, 31
        %s619 = scalar_select %p618, %s617, 31
        %s620 = smul.addr %s619, 8
        %s621 = scalar_lea.vmem %s5, %s620
      $region52: #{sequential_forward.1} parent=47 // pred_fallthru
        _
    $region48: #{sequential_forward.1} parent=5 // pred_fallthru
      _
  $region6: #{sequential_forward.1} parent=0 // loop_footer
    %s15 = sadd.s32 1, %s11
  $region7: #{sequential_forward.1} parent=0 // loop_footer_branch
    %10 = sbr.rel target = $region3
  $region8: #{sequential_forward.1} parent=0 // loop_exit
    _

</llo_original>
